<compile_context>
chip_gen: v5e
topology: v5e:2x2
jax: 0.10.0
libtpu: 0.0.40
codegen_flags: <defaults>
</compile_context>

<pallas_src>
import functools

import jax
import jax.numpy as jnp
from jax.experimental import pallas as pl
from jax.experimental.pallas import tpu as pltpu


# ---------------------------------------------------------------------------
# Fused single-pass kernel: pool + FC stack + scale, one image per grid step.
#   x:  (N, C, M)  block (1, C, M)   -- spatial on lanes, channels on sublanes
#   w1: (C, Cmid), b1: (1, Cmid), w2: (Cmid, C), b2: (1, C)   (VMEM-resident)
#   o:  (N, C, M)  block (1, C, M)
# ---------------------------------------------------------------------------
def _se_fused_kernel(x_ref, w1_ref, b1_ref, w2_ref, b2_ref, o_ref,
                     *, inv_hw, slope):
    xf = x_ref[...].astype(jnp.float32)                       # (1, C, M)
    pooled = jnp.sum(xf, axis=-1) * inv_hw                    # (1, C) AdaptiveAvgPool2d(1)
    h = jnp.dot(pooled, w1_ref[...],
                preferred_element_type=jnp.float32) + b1_ref[...]
    h = jnp.where(h > 0.0, h, slope * h)                      # LeakyReLU(0.2)
    z = jnp.dot(h, w2_ref[...],
                preferred_element_type=jnp.float32) + b2_ref[...]
    mask = 1.0 / (1.0 + jnp.exp(-z))                          # exact Sigmoid, (1, C)
    # One lane->sublane relayout per image, then lane-broadcast multiply.
    o_ref[...] = (xf * mask[..., None]).astype(o_ref.dtype)


# ---------------------------------------------------------------------------
# Fallback kernel 1: tiled spatial reduction + fused FC epilogue.
#   acc scratch is (1, C, 128): inner loop is VALU-only segment adds; the
#   cross-lane reduce + FC + sigmoid run once per image on the last tile.
#   mask out block is (1, C, 1) so the scale kernel sees C on sublanes.
# ---------------------------------------------------------------------------
def _se_pool_fc_kernel(x_ref, w1_ref, b1_ref, w2_ref, b2_ref, mask_ref, acc_ref,
                       *, inv_hw, slope, tile_m):
    m_idx = pl.program_id(1)

    @pl.when(m_idx == 0)
    def _():
        acc_ref[...] = jnp.zeros_like(acc_ref)

    xt = x_ref[...].astype(jnp.float32)                       # (1, C, TILE_M)
    part = xt[:, :, 0:128]
    for s in range(1, tile_m // 128):                         # static, vreg-aligned slices
        part = part + xt[:, :, s * 128:(s + 1) * 128]
    acc_ref[...] += part                                      # (1, C, 128)

    @pl.when(m_idx == pl.num_programs(1) - 1)
    def _():
        pooled = jnp.sum(acc_ref[...], axis=-1) * inv_hw      # (1, C), once per image
        h = jnp.dot(pooled, w1_ref[...],
                    preferred_element_type=jnp.float32) + b1_ref[...]
        h = jnp.where(h > 0.0, h, slope * h)                  # LeakyReLU(0.2)
        z = jnp.dot(h, w2_ref[...],
                    preferred_element_type=jnp.float32) + b2_ref[...]
        mask = 1.0 / (1.0 + jnp.exp(-z))                      # exact Sigmoid
        mask_ref[...] = mask[..., None]                       # (1, C, 1): C on sublanes


# ---------------------------------------------------------------------------
# Fallback kernel 2: out[n, c, s] = x[n, c, s] * mask[n, c, 0]
# mask comes in with C on sublanes -> pure lane-broadcast, no per-tile relayout.
# ---------------------------------------------------------------------------
def _se_scale_kernel(x_ref, mask_ref, o_ref):
    o_ref[...] = (x_ref[...] * mask_ref[...]).astype(o_ref.dtype)


def _fallback_tile_m(m_padded, c, itemsize,
                     budget_bytes=24 * 1024 * 1024, max_elems=8192):
    """Largest multiple of 128 dividing m_padded s.t. the scale pass's 4 live
    (C, TILE_M) slabs stay within the VMEM budget (and the unroll stays sane)."""
    cap = max(128, budget_bytes // (4 * c * itemsize))
    cap = min(cap, max_elems, m_padded)
    best = 128
    for d in range(1, m_padded // 128 + 1):
        t = 128 * d
        if t <= cap and m_padded % t == 0:
            best = t
    return best


def se_layer_forward(params, x_nchw, *, slope=0.2,
                     fused_slab_bytes_cap=6 * 1024 * 1024):
    n, c, h, w = x_nchw.shape
    m = h * w
    c_mid = params["w1"].shape[-1]
    x3 = x_nchw.reshape(n, c, m)

    w1 = params["w1"].astype(jnp.float32)                     # (C, Cmid)
    b1 = params["b1"].reshape(1, c_mid).astype(jnp.float32)   # (1, Cmid)
    w2 = params["w2"].astype(jnp.float32)                     # (Cmid, C)
    b2 = params["b2"].reshape(1, c).astype(jnp.float32)       # (1, C)

    inv_hw = 1.0 / float(m)
    itemsize = jnp.dtype(x_nchw.dtype).itemsize
    slab_bytes = c * m * itemsize                             # one image's x slab

    # ---------------- primary path: single pass over x ----------------
    if slab_bytes <= fused_slab_bytes_cap:
        fused = functools.partial(_se_fused_kernel, inv_hw=inv_hw, slope=slope)
        out = pl.pallas_call(
            fused,
            out_shape=jax.ShapeDtypeStruct((n, c, m), x_nchw.dtype),
            grid=(n,),
            in_specs=[
                pl.BlockSpec((1, c, m), lambda i: (i, 0, 0)),
                pl.BlockSpec((c, c_mid), lambda i: (0, 0)),
                pl.BlockSpec((1, c_mid), lambda i: (0, 0)),
                pl.BlockSpec((c_mid, c), lambda i: (0, 0)),
                pl.BlockSpec((1, c), lambda i: (0, 0)),
            ],
            out_specs=pl.BlockSpec((1, c, m), lambda i: (i, 0, 0)),
            compiler_params=pltpu.CompilerParams(
                dimension_semantics=("parallel",)),
        )(x3, w1, b1, w2, b2)
        return out.reshape(n, c, h, w)

    # ---------------- fallback: two passes, tiled spatial axis ----------------
    m_pad = ((m + 127) // 128) * 128
    if m_pad != m:
        # Zero padding keeps the sum exact (inv_hw uses the true H*W); padded
        # columns are sliced off after the scale pass.
        x3 = jnp.pad(x3, ((0, 0), (0, 0), (0, m_pad - m)))
    tile_m = _fallback_tile_m(m_pad, c, itemsize)
    m_tiles = m_pad // tile_m

    pool_kernel = functools.partial(
        _se_pool_fc_kernel, inv_hw=inv_hw, slope=slope, tile_m=tile_m)

    mask = pl.pallas_call(
        pool_kernel,
        out_shape=jax.ShapeDtypeStruct((n, c, 1), jnp.float32),
        grid=(n, m_tiles),
        in_specs=[
            pl.BlockSpec((1, c, tile_m), lambda i, j: (i, 0, j)),
            pl.BlockSpec((c, c_mid), lambda i, j: (0, 0)),
            pl.BlockSpec((1, c_mid), lambda i, j: (0, 0)),
            pl.BlockSpec((c_mid, c), lambda i, j: (0, 0)),
            pl.BlockSpec((1, c), lambda i, j: (0, 0)),
        ],
        out_specs=pl.BlockSpec((1, c, 1), lambda i, j: (i, 0, 0)),
        scratch_shapes=[pltpu.VMEM((1, c, 128), jnp.float32)],
        compiler_params=pltpu.CompilerParams(
            dimension_semantics=("parallel", "arbitrary")),
    )(x3, w1, b1, w2, b2)

    out = pl.pallas_call(
        _se_scale_kernel,
        out_shape=jax.ShapeDtypeStruct((n, c, m_pad), x_nchw.dtype),
        grid=(n, m_tiles),
        in_specs=[
            pl.BlockSpec((1, c, tile_m), lambda i, j: (i, 0, j)),
            pl.BlockSpec((1, c, 1), lambda i, j: (i, 0, 0)),
        ],
        out_specs=pl.BlockSpec((1, c, tile_m), lambda i, j: (i, 0, j)),
        compiler_params=pltpu.CompilerParams(
            dimension_semantics=("parallel", "parallel")),
    )(x3, mask)

    if m_pad != m:
        out = out[:, :, :m]
    return out.reshape(n, c, h, w)


# ---------------------------------------------------------------------------
# Pure-JAX reference for a correctness sanity check.
# ---------------------------------------------------------------------------
def se_layer_reference(params, x, *, slope=0.2):
    pooled = x.mean(axis=(2, 3))                              # (N, C)
    h1 = pooled @ params["w1"] + params["b1"]
    h1 = jnp.where(h1 > 0.0, h1, slope * h1)
    z = h1 @ params["w2"] + params["b2"]
    mask = jax.nn.sigmoid(z)
    return x * mask[:, :, None, None]


if __name__ == "__main__":
    key = jax.random.PRNGKey(0)
    kx, k1, k2, k3, k4 = jax.random.split(key, 5)

    # num_filter // 16 must be >= 1, so use 64 channels (SELayer(64) -> mid=4).
    N, C, H, W = 2, 64, 16, 16
    C_MID = C // 16

    x = jax.random.normal(kx, (N, C, H, W), jnp.float32)      # NCHW like PyTorch
    params = {
        "w1": jax.random.normal(k1, (C, C_MID), jnp.float32) / jnp.sqrt(float(C)),
        "b1": jax.random.normal(k2, (C_MID,), jnp.float32) * 0.01,
        "w2": jax.random.normal(k3, (C_MID, C), jnp.float32) / jnp.sqrt(float(C_MID)),
        "b2": jax.random.normal(k4, (C,), jnp.float32) * 0.01,
    }

    out = jax.jit(se_layer_forward)(params, x)
    out = jax.block_until_ready(out)

    assert out.shape == (N, C, H, W)
    assert bool(jnp.all(jnp.isfinite(out)))

    ref = se_layer_reference(params, x)
    # Sigmoid is exact now; residual differences come only from MXU-vs-XLA
    # matmul rounding in the tiny FC stack.
    assert bool(jnp.allclose(out, ref, rtol=1e-3, atol=1e-3))

    print("KERNEL_OK")
</pallas_src>

<mosaic_0001>
module attributes {stable_mosaic.version = 11 : i64} {
  func.func @_se_fused_kernel(%arg0: i32, %arg1: memref<1x64x256xf32, #tpu.memory_space<vmem>>, %arg2: memref<64x4xf32, #tpu.memory_space<vmem>>, %arg3: memref<1x4xf32, #tpu.memory_space<vmem>>, %arg4: memref<4x64xf32, #tpu.memory_space<vmem>>, %arg5: memref<1x64xf32, #tpu.memory_space<vmem>>, %arg6: memref<1x64x256xf32, #tpu.memory_space<vmem>>) attributes {dimension_semantics = [#tpu.dimension_semantics<parallel>], iteration_bounds = array<i64: 2>, scalar_prefetch = 0 : i64, scratch_operands = 0 : i64, tpu.core_type = #tpu.core_type<tc>, window_params = [{transform_indices = @transform_0, window_bounds = array<i64: 1, 64, 256>}, {pipeline_mode = #tpu.pipeline_mode<synchronous>, transform_indices = @transform_1, window_bounds = array<i64: 64, 4>}, {pipeline_mode = #tpu.pipeline_mode<synchronous>, transform_indices = @transform_2, window_bounds = array<i64: 1, 4>}, {pipeline_mode = #tpu.pipeline_mode<synchronous>, transform_indices = @transform_3, window_bounds = array<i64: 4, 64>}, {pipeline_mode = #tpu.pipeline_mode<synchronous>, transform_indices = @transform_4, window_bounds = array<i64: 1, 64>}, {transform_indices = @transform_5, window_bounds = array<i64: 1, 64, 256>}]} {
    %c0 = arith.constant 0 : index
    %c0_0 = arith.constant 0 : index
    %c0_1 = arith.constant 0 : index
    %0 = vector.load %arg1[%c0, %c0_0, %c0_1] : memref<1x64x256xf32, #tpu.memory_space<vmem>>, vector<1x64x256xf32>
    %cst = arith.constant dense<0.000000e+00> : vector<1x64xf32>
    %1 = vector.multi_reduction <add>, %0, %cst [2] : vector<1x64x256xf32> to vector<1x64xf32>
    %cst_2 = arith.constant 3.906250e-03 : f32
    %2 = vector.broadcast %cst_2 : f32 to vector<1x64xf32>
    %3 = arith.mulf %1, %2 : vector<1x64xf32>
    %c0_3 = arith.constant 0 : index
    %c0_4 = arith.constant 0 : index
    %4 = vector.load %arg2[%c0_3, %c0_4] : memref<64x4xf32, #tpu.memory_space<vmem>>, vector<64x4xf32>
    %cst_5 = arith.constant dense<0.000000e+00> : vector<1x4xf32>
    %5 = tpu.matmul %3, %4, %cst_5 {dimension_numbers = #tpu.dot_dimension_numbers<[1], [0], [0], [1], [0, 0, 1, 1], [], []>} : vector<1x64xf32>, vector<64x4xf32>, vector<1x4xf32> -> vector<1x4xf32>
    %c0_6 = arith.constant 0 : index
    %c0_7 = arith.constant 0 : index
    %6 = vector.load %arg3[%c0_6, %c0_7] : memref<1x4xf32, #tpu.memory_space<vmem>>, vector<1x4xf32>
    %7 = arith.addf %5, %6 : vector<1x4xf32>
    %cst_8 = arith.constant 0.000000e+00 : f32
    %8 = vector.broadcast %cst_8 : f32 to vector<1x4xf32>
    %9 = arith.cmpf ogt, %7, %8 : vector<1x4xf32>
    %cst_9 = arith.constant 2.000000e-01 : f32
    %10 = vector.broadcast %cst_9 : f32 to vector<1x4xf32>
    %11 = arith.mulf %10, %7 : vector<1x4xf32>
    %12 = arith.select %9, %7, %11 : vector<1x4xi1>, vector<1x4xf32>
    %c0_10 = arith.constant 0 : index
    %c0_11 = arith.constant 0 : index
    %13 = vector.load %arg4[%c0_10, %c0_11] : memref<4x64xf32, #tpu.memory_space<vmem>>, vector<4x64xf32>
    %cst_12 = arith.constant dense<0.000000e+00> : vector<1x64xf32>
    %14 = tpu.matmul %12, %13, %cst_12 {dimension_numbers = #tpu.dot_dimension_numbers<[1], [0], [0], [1], [0, 0, 1, 1], [], []>} : vector<1x4xf32>, vector<4x64xf32>, vector<1x64xf32> -> vector<1x64xf32>
    %c0_13 = arith.constant 0 : index
    %c0_14 = arith.constant 0 : index
    %15 = vector.load %arg5[%c0_13, %c0_14] : memref<1x64xf32, #tpu.memory_space<vmem>>, vector<1x64xf32>
    %16 = arith.addf %14, %15 : vector<1x64xf32>
    %cst_15 = arith.constant 0.000000e+00 : f32
    %17 = vector.broadcast %cst_15 : f32 to vector<1x64xf32>
    %18 = arith.subf %17, %16 : vector<1x64xf32>
    %19 = math.exp %18 : vector<1x64xf32>
    %cst_16 = arith.constant 1.000000e+00 : f32
    %20 = vector.broadcast %cst_16 : f32 to vector<1x64xf32>
    %21 = arith.addf %20, %19 : vector<1x64xf32>
    %cst_17 = arith.constant 1.000000e+00 : f32
    %22 = vector.broadcast %cst_17 : f32 to vector<1x64xf32>
    %23 = arith.divf %22, %21 : vector<1x64xf32>
    %24 = vector.shape_cast %23 : vector<1x64xf32> to vector<1x64x1xf32>
    %25 = vector.broadcast %24 : vector<1x64x1xf32> to vector<1x64x256xf32>
    %26 = arith.mulf %0, %25 : vector<1x64x256xf32>
    %c0_18 = arith.constant 0 : index
    %c0_19 = arith.constant 0 : index
    %c0_20 = arith.constant 0 : index
    %27 = vector.load %arg6[%c0_18, %c0_19, %c0_20] : memref<1x64x256xf32, #tpu.memory_space<vmem>>, vector<1x64x256xf32>
    tpu.vector_store %arg6[%c0_18, %c0_19, %c0_20], %26 {strides = array<i32>} : memref<1x64x256xf32, #tpu.memory_space<vmem>>, vector<1x64x256xf32>,
    return
  }
  func.func @transform_0(%arg0: i32) -> (i32, i32, i32) {
    %c0_i32 = arith.constant 0 : i32
    %c0_i32_0 = arith.constant 0 : i32
    %c0_i32_1 = arith.constant 0 : i32
    return %arg0, %c0_i32, %c0_i32_0 : i32, i32, i32
  }
  func.func @transform_1(%arg0: i32) -> (i32, i32) {
    %c0_i32 = arith.constant 0 : i32
    %c0_i32_0 = arith.constant 0 : i32
    %c0_i32_1 = arith.constant 0 : i32
    return %c0_i32, %c0_i32_0 : i32, i32
  }
  func.func @transform_2(%arg0: i32) -> (i32, i32) {
    %c0_i32 = arith.constant 0 : i32
    %c0_i32_0 = arith.constant 0 : i32
    %c0_i32_1 = arith.constant 0 : i32
    return %c0_i32, %c0_i32_0 : i32, i32
  }
  func.func @transform_3(%arg0: i32) -> (i32, i32) {
    %c0_i32 = arith.constant 0 : i32
    %c0_i32_0 = arith.constant 0 : i32
    %c0_i32_1 = arith.constant 0 : i32
    return %c0_i32, %c0_i32_0 : i32, i32
  }
  func.func @transform_4(%arg0: i32) -> (i32, i32) {
    %c0_i32 = arith.constant 0 : i32
    %c0_i32_0 = arith.constant 0 : i32
    %c0_i32_1 = arith.constant 0 : i32
    return %c0_i32, %c0_i32_0 : i32, i32
  }
  func.func @transform_5(%arg0: i32) -> (i32, i32, i32) {
    %c0_i32 = arith.constant 0 : i32
    %c0_i32_0 = arith.constant 0 : i32
    %c0_i32_1 = arith.constant 0 : i32
    return %arg0, %c0_i32, %c0_i32_0 : i32, i32, i32
  }
}

</mosaic_0001>

<llo_original>
// kernel: se_layer_forward.1
$region0: #{se_layer_forward.1}
  #allocation0 [shape = 'u32[]', space=smem, size = 0x4, offset = 0x4, fixed_abs, tag = 'smem constant byte address 0x4 - core index']
  #allocation1 [shape = 'u32[72,128]{1,0:T(1,128)}', space=vmem, size = 0x9000, scoped, tag = 'internal scratch']
  %s0 = inlined_call_operand.vmem [shape: f32[2,64,256], index: 0, kind: input, shape index: {}]
  %s1 = inlined_call_operand.vmem [shape: f32[64,4], index: 1, kind: input, shape index: {}]
  %s2 = inlined_call_operand.vmem [shape: f32[1,4], index: 2, kind: input, shape index: {}]
  %s3 = inlined_call_operand.vmem [shape: f32[4,64], index: 3, kind: input, shape index: {}]
  %s4 = inlined_call_operand.vmem [shape: f32[1,64], index: 4, kind: input, shape index: {}]
  %s5 = inlined_call_operand.vmem [shape: f32[2,64,256], index: 5, kind: output, shape index: {}]
  %s6 = sld [smem:[#allocation0]]
  $region53: #{se_layer_forward.1} parent=0
    _
  %s8 = ssub.s32 1, %s6
  %s9 = scalar_select 0, %s8, %s6
  loop: start=0, step=1, limit=4
  $region2: #{se_layer_forward.1} parent=0 // loop_pre_header
    _
  $region3: #{se_layer_forward.1} parent=0 // loop_header
    %s11 = sphi 0, %s15
    %p12 = scmp.ge.s32.totalorder %s11, 4
    %s21 = sphi 0, %s23
    %s24 = sphi 0, %s21
    %s25 = sphi 0, %s24
    %s41 = sphi 0, %s25
    %s45 = sphi 0, %s45
    %s47 = sphi 0, %s45
    %s48 = sphi 0, %s47
    %s62 = sphi 0, %s48
    %s66 = sphi 0, %s66
    %s68 = sphi 0, %s66
    %s69 = sphi 0, %s68
    %s83 = sphi 0, %s69
    %s87 = sphi 0, %s87
    %s89 = sphi 0, %s87
    %s90 = sphi 0, %s89
    %s104 = sphi 0, %s90
    %s108 = sphi 0, %s108
    %s110 = sphi 0, %s108
    %s111 = sphi 0, %s110
    %s125 = sphi 0, %s111
    %s131 = sphi 0, %s133
    %s134 = sphi 0, %s131
    %s135 = sphi 0, %s134
    %s151 = sphi 0, %s135
  $region4: #{se_layer_forward.1} parent=0 // loop_header_branch
    %14 = sbr.rel (%p12) target = $region8
  $region5: #{se_layer_forward.1} parent=0 // loop_body
    %s16 = ssub.s32 %s11, 1
    %s17 = ssub.s32 %s11, 2
    %s18 = sadd.s32 %s11, 1
    %s19 = ssub.s32 %s11, %s18
    %p20 = scmp.eq.s32.totalorder %s19, 0
    %s22 = sadd.s32 %s21, 1
    %s23 = scalar_select %p20, %s21, %s22
    %p26 = pneg %p20
    %p27 = scmp.eq.s32.totalorder %s11, 1
    %p28 = por %p26, %p27
    %p29 = scmp.ne.s32.totalorder %s21, %s24
    %p30 = scmp.eq.s32.totalorder %s11, 0
    %p31 = por %p29, %p30
    %p32 = scmp.ne.s32.totalorder %s21, %s24
    %p33 = scmp.eq.s32.totalorder %s16, 1
    %p34 = por %p32, %p33
    %p35 = scmp.ne.s32.totalorder %s24, %s25
    %p36 = scmp.eq.s32.totalorder %s16, 0
    %p37 = por %p35, %p36
    %p38 = scmp.ne.s32.totalorder %s24, %s25
    %p39 = scmp.eq.s32.totalorder %s17, 1
    %p40 = por %p38, %p39
    %p42 = scmp.ne.s32.totalorder %s25, %s41
    %p43 = scmp.eq.s32.totalorder %s17, 0
    %p44 = por %p42, %p43
    %s46 = sadd.s32 %s45, 1
    %p49 = scmp.eq.s32.totalorder %s11, 1
    %p50 = scmp.ne.s32.totalorder %s45, %s47
    %p51 = scmp.eq.s32.totalorder %s11, 0
    %p52 = por %p50, %p51
    %p53 = scmp.ne.s32.totalorder %s45, %s47
    %p54 = scmp.eq.s32.totalorder %s16, 1
    %p55 = por %p53, %p54
    %p56 = scmp.ne.s32.totalorder %s47, %s48
    %p57 = scmp.eq.s32.totalorder %s16, 0
    %p58 = por %p56, %p57
    %p59 = scmp.ne.s32.totalorder %s47, %s48
    %p60 = scmp.eq.s32.totalorder %s17, 1
    %p61 = por %p59, %p60
    %p63 = scmp.ne.s32.totalorder %s48, %s62
    %p64 = scmp.eq.s32.totalorder %s17, 0
    %p65 = por %p63, %p64
    %s67 = sadd.s32 %s66, 1
    %p70 = scmp.eq.s32.totalorder %s11, 1
    %p71 = scmp.ne.s32.totalorder %s66, %s68
    %p72 = scmp.eq.s32.totalorder %s11, 0
    %p73 = por %p71, %p72
    %p74 = scmp.ne.s32.totalorder %s66, %s68
    %p75 = scmp.eq.s32.totalorder %s16, 1
    %p76 = por %p74, %p75
    %p77 = scmp.ne.s32.totalorder %s68, %s69
    %p78 = scmp.eq.s32.totalorder %s16, 0
    %p79 = por %p77, %p78
    %p80 = scmp.ne.s32.totalorder %s68, %s69
    %p81 = scmp.eq.s32.totalorder %s17, 1
    %p82 = por %p80, %p81
    %p84 = scmp.ne.s32.totalorder %s69, %s83
    %p85 = scmp.eq.s32.totalorder %s17, 0
    %p86 = por %p84, %p85
    %s88 = sadd.s32 %s87, 1
    %p91 = scmp.eq.s32.totalorder %s11, 1
    %p92 = scmp.ne.s32.totalorder %s87, %s89
    %p93 = scmp.eq.s32.totalorder %s11, 0
    %p94 = por %p92, %p93
    %p95 = scmp.ne.s32.totalorder %s87, %s89
    %p96 = scmp.eq.s32.totalorder %s16, 1
    %p97 = por %p95, %p96
    %p98 = scmp.ne.s32.totalorder %s89, %s90
    %p99 = scmp.eq.s32.totalorder %s16, 0
    %p100 = por %p98, %p99
    %p101 = scmp.ne.s32.totalorder %s89, %s90
    %p102 = scmp.eq.s32.totalorder %s17, 1
    %p103 = por %p101, %p102
    %p105 = scmp.ne.s32.totalorder %s90, %s104
    %p106 = scmp.eq.s32.totalorder %s17, 0
    %p107 = por %p105, %p106
    %s109 = sadd.s32 %s108, 1
    %p112 = scmp.eq.s32.totalorder %s11, 1
    %p113 = scmp.ne.s32.totalorder %s108, %s110
    %p114 = scmp.eq.s32.totalorder %s11, 0
    %p115 = por %p113, %p114
    %p116 = scmp.ne.s32.totalorder %s108, %s110
    %p117 = scmp.eq.s32.totalorder %s16, 1
    %p118 = por %p116, %p117
    %p119 = scmp.ne.s32.totalorder %s110, %s111
    %p120 = scmp.eq.s32.totalorder %s16, 0
    %p121 = por %p119, %p120
    %p122 = scmp.ne.s32.totalorder %s110, %s111
    %p123 = scmp.eq.s32.totalorder %s17, 1
    %p124 = por %p122, %p123
    %p126 = scmp.ne.s32.totalorder %s111, %s125
    %p127 = scmp.eq.s32.totalorder %s17, 0
    %p128 = por %p126, %p127
    %s129 = ssub.s32 %s11, %s18
    %p130 = scmp.eq.s32.totalorder %s129, 0
    %s132 = sadd.s32 %s131, 1
    %s133 = scalar_select %p130, %s131, %s132
    %p136 = pneg %p130
    %p137 = scmp.eq.s32.totalorder %s11, 1
    %p138 = por %p136, %p137
    %p139 = scmp.ne.s32.totalorder %s131, %s134
    %p140 = scmp.eq.s32.totalorder %s11, 0
    %p141 = por %p139, %p140
    %p142 = scmp.ne.s32.totalorder %s131, %s134
    %p143 = scmp.eq.s32.totalorder %s16, 1
    %p144 = por %p142, %p143
    %p145 = scmp.ne.s32.totalorder %s134, %s135
    %p146 = scmp.eq.s32.totalorder %s16, 0
    %p147 = por %p145, %p146
    %p148 = scmp.ne.s32.totalorder %s134, %s135
    %p149 = scmp.eq.s32.totalorder %s17, 1
    %p150 = por %p148, %p149
    %p152 = scmp.ne.s32.totalorder %s135, %s151
    %p153 = scmp.eq.s32.totalorder %s17, 0
    %p154 = por %p152, %p153
    %p155 = scmp.le.s32.totalorder 1, %s11
    %p156 = scmp.lt.s32.totalorder %s11, 3
    %p157 = pnand %p155, %p156
    %p158 = pneg %p157
    // Predicated region
    $region9: #{se_layer_forward.1} parent=5 // pred_check
      _
    $region10: #{se_layer_forward.1} parent=5 // pred_check_branch
      %160 = sbr.rel (%p157) target = $region12
    $region11: #{se_layer_forward.1} parent=5 // pred_region
      %s161 = ssub.s32 %s11, 1
      // Predicated region
      $region13: #{se_layer_forward.1} parent=11 // pred_check
        %p162 = pneg %p58
      $region14: #{se_layer_forward.1} parent=11 // pred_check_branch
        %164 = sbr.rel (%p162) target = $region16
      $region15: #{se_layer_forward.1} parent=11 // pred_region
        _
      $region16: #{se_layer_forward.1} parent=11 // pred_fallthru
        _
      // Predicated region
      $region17: #{se_layer_forward.1} parent=11 // pred_check
        %p165 = pneg %p79
      $region18: #{se_layer_forward.1} parent=11 // pred_check_branch
        %167 = sbr.rel (%p165) target = $region20
      $region19: #{se_layer_forward.1} parent=11 // pred_region
        _
      $region20: #{se_layer_forward.1} parent=11 // pred_fallthru
        _
      // Predicated region
      $region21: #{se_layer_forward.1} parent=11 // pred_check
        %p168 = pneg %p100
      $region22: #{se_layer_forward.1} parent=11 // pred_check_branch
        %170 = sbr.rel (%p168) target = $region24
      $region23: #{se_layer_forward.1} parent=11 // pred_region
        _
      $region24: #{se_layer_forward.1} parent=11 // pred_fallthru
        _
      // Predicated region
      $region25: #{se_layer_forward.1} parent=11 // pred_check
        %p171 = pneg %p121
      $region26: #{se_layer_forward.1} parent=11 // pred_check_branch
        %173 = sbr.rel (%p171) target = $region28
      $region27: #{se_layer_forward.1} parent=11 // pred_region
        _
      $region28: #{se_layer_forward.1} parent=11 // pred_fallthru
        _
    $region12: #{se_layer_forward.1} parent=5 // pred_fallthru
      _
    %p174 = scmp.lt.s32.totalorder %s11, 2
    // Predicated region
    $region29: #{se_layer_forward.1} parent=5 // pred_check
      %p175 = pneg %p174
    $region30: #{se_layer_forward.1} parent=5 // pred_check_branch
      %177 = sbr.rel (%p175) target = $region32
    $region31: #{se_layer_forward.1} parent=5 // pred_region
      // Predicated region
      $region33: #{se_layer_forward.1} parent=31 // pred_check
        %p178 = pneg %p31
      $region34: #{se_layer_forward.1} parent=31 // pred_check_branch
        %180 = sbr.rel (%p178) target = $region36
      $region35: #{se_layer_forward.1} parent=31 // pred_region
        %p181 = scmp.lt.s32.totalorder %s11, 1
        %s182 = scalar_select %p181, %s11, 1
        %s183 = smul.addr %s182, 16
        %s184 = smul.addr %s183, 8
        %s185 = scalar_lea.vmem %s0, %s184
      $region36: #{se_layer_forward.1} parent=31 // pred_fallthru
        _
    $region32: #{se_layer_forward.1} parent=5 // pred_fallthru
      _
    %p186 = scmp.le.s32.totalorder 1, %s11
    %p187 = scmp.lt.s32.totalorder %s11, 3
    %p188 = pnand %p186, %p187
    %p189 = pneg %p188
    // Predicated region
    $region37: #{se_layer_forward.1} parent=5 // pred_check
      _
    $region38: #{se_layer_forward.1} parent=5 // pred_check_branch
      %191 = sbr.rel (%p188) target = $region40
    $region39: #{se_layer_forward.1} parent=5 // pred_region
      %s192 = ssub.s32 %s11, 1
      %p193 = scmp.lt.s32.totalorder %s16, 1
      %s194 = scalar_select %p193, %s16, 1
      %s195 = smul.addr %s194, 16
      %s196 = smul.addr %s195, 8
      %s197 = scalar_lea.vmem %s0, %s196
      %p198 = pneg %p37
      %p199 = pneg %p34
      %p200 = pneg %p58
      %p201 = pneg %p55
      %p202 = pneg %p79
      %p203 = pneg %p76
      %p204 = pneg %p100
      %p205 = pneg %p97
      %p206 = pneg %p121
      %p207 = pneg %p118
      %p208 = pneg %p147
      %p209 = pneg %p144
      %p210 = scmp.lt.s32.totalorder %s16, 1
      %s211 = scalar_select %p210, %s16, 1
      %s212 = smul.addr %s211, 16
      %s213 = smul.addr %s212, 8
      %s214 = scalar_lea.vmem %s5, %s213
      %p215 = scmp.lt.s32.totalorder %s16, 1
      %s216 = scalar_select %p215, %s16, 1
      %s217 = smul.addr %s216, 16
      %s218 = smul.addr %s217, 8
      %s219 = scalar_lea.vmem %s0, %s218
      %p220 = scmp.lt.s32.totalorder %s16, 1
      %s221 = scalar_select %p220, %s16, 1
      %s222 = smul.addr %s221, 16
      %s223 = smul.addr %s222, 8
      %s224 = scalar_lea.vmem %s5, %s223
      %v225 = vld [vmem:[%s219] sm:$0xff]
      %v226 = vld [vmem:[%s219 + $0x8] sm:$0xff]
      %v227 = vld [vmem:[%s219 + $0x10] sm:$0xff]
      %v228 = vld [vmem:[%s219 + $0x18] sm:$0xff]
      %v229 = vld [vmem:[%s219 + $0x20] sm:$0xff]
      %v230 = vld [vmem:[%s219 + $0x28] sm:$0xff]
      %v231 = vld [vmem:[%s219 + $0x30] sm:$0xff]
      %v232 = vld [vmem:[%s219 + $0x38] sm:$0xff]
      %v233 = vld [vmem:[%s219 + $0x40] sm:$0xff]
      %v234 = vld [vmem:[%s219 + $0x48] sm:$0xff]
      %v235 = vld [vmem:[%s219 + $0x50] sm:$0xff]
      %v236 = vld [vmem:[%s219 + $0x58] sm:$0xff]
      %v237 = vld [vmem:[%s219 + $0x60] sm:$0xff]
      %v238 = vld [vmem:[%s219 + $0x68] sm:$0xff]
      %v239 = vld [vmem:[%s219 + $0x70] sm:$0xff]
      %v240 = vld [vmem:[%s219 + $0x78] sm:$0xff]
      %v241 = vadd.f32 %v225, %v226
      %242 = vadd.xlane.f32.xlu0 %v241
      %v243 = vpop.xlane.xlu0 %242
      %v244 = vadd.f32 %v227, %v228
      %245 = vadd.xlane.f32.xlu0 %v244
      %v246 = vpop.xlane.xlu0 %245
      %v247 = vadd.f32 %v229, %v230
      %248 = vadd.xlane.f32.xlu0 %v247
      %v249 = vpop.xlane.xlu0 %248
      %v250 = vadd.f32 %v231, %v232
      %251 = vadd.xlane.f32.xlu0 %v250
      %v252 = vpop.xlane.xlu0 %251
      %v253 = vadd.f32 %v233, %v234
      %254 = vadd.xlane.f32.xlu0 %v253
      %v255 = vpop.xlane.xlu0 %254
      %v256 = vadd.f32 %v235, %v236
      %257 = vadd.xlane.f32.xlu0 %v256
      %v258 = vpop.xlane.xlu0 %257
      %v259 = vadd.f32 %v237, %v238
      %260 = vadd.xlane.f32.xlu0 %v259
      %v261 = vpop.xlane.xlu0 %260
      %v262 = vadd.f32 %v239, %v240
      %263 = vadd.xlane.f32.xlu0 %v262
      %v264 = vpop.xlane.xlu0 %263
      %v265 = vmul.f32 %v243, 0.00390625
      %v266 = vmul.f32 %v246, 0.00390625
      %v267 = vmul.f32 %v249, 0.00390625
      %v268 = vmul.f32 %v252, 0.00390625
      %v269 = vmul.f32 %v255, 0.00390625
      %v270 = vmul.f32 %v258, 0.00390625
      %v271 = vmul.f32 %v261, 0.00390625
      %v272 = vmul.f32 %v264, 0.00390625
      %v273 = vld [vmem:[%s1] sm:$0xff]
      %v274 = vld [vmem:[%s1 + $0x8] sm:$0xff]
      %v275 = vld [vmem:[%s1 + $0x10] sm:$0xff]
      %v276 = vld [vmem:[%s1 + $0x18] sm:$0xff]
      %v277 = vld [vmem:[%s1 + $0x20] sm:$0xff]
      %v278 = vld [vmem:[%s1 + $0x28] sm:$0xff]
      %v279 = vld [vmem:[%s1 + $0x30] sm:$0xff]
      %v280 = vld [vmem:[%s1 + $0x38] sm:$0xff]
      %v281 = vld [vmem:[%s2] sm:$0x1]
      %v290 = vlaneseq
      %v291 = vand.u32 %v290, 127
      %v292 = vperm.slane %v265, %v291
      %v293 = vadd.s32 %v291, 4294967288
      %v294 = vperm.slane %v266, %v293
      %vm295 = vcmask 130112
      %v296 = vsel %vm295, %v294, %v292
      %v297 = vadd.s32 %v291, 4294967280
      %v298 = vperm.slane %v267, %v297
      %vm299 = vcmask 195712
      %v300 = vsel %vm299, %v298, %v296
      %v301 = vadd.s32 %v291, 4294967272
      %v302 = vperm.slane %v268, %v301
      %vm303 = vcmask 261312
      %v304 = vsel %vm303, %v302, %v300
      %v305 = vadd.s32 %v291, 4294967264
      %v306 = vperm.slane %v269, %v305
      %vm307 = vcmask 326912
      %v308 = vsel %vm307, %v306, %v304
      %v309 = vadd.s32 %v291, 4294967256
      %v310 = vperm.slane %v270, %v309
      %vm311 = vcmask 392512
      %v312 = vsel %vm311, %v310, %v308
      %v313 = vadd.s32 %v291, 4294967248
      %v314 = vperm.slane %v271, %v313
      %vm315 = vcmask 458112
      %v316 = vsel %vm315, %v314, %v312
      %v317 = vadd.s32 %v291, 4294967240
      %v318 = vperm.slane %v272, %v317
      %vm319 = vcmask 523712
      %v320 = vsel %vm319, %v318, %v316
      %vm321 = vcmask 523264
      %v322 = vsel %vm321, %v320, 0
      %324 = vmatpush.msra.mxu0 0.0
      %325 = vmatpush.msra.mxu0 0.0
      %326 = vmatpush.msra.mxu0 0.0
      %327 = vmatpush.msra.mxu0 0.0
      %328 = vmatpush.msra.mxu0 0.0
      %329 = vmatpush.msra.mxu0 0.0
      %330 = vmatpush.msra.mxu0 0.0
      %331 = vmatpush.msra.mxu0 0.0
      %332 = vmatpush.msra.mxu0 %v280
      %333 = vmatpush.msra.mxu0 %v279
      %334 = vmatpush.msra.mxu0 %v278
      %335 = vmatpush.msra.mxu0 %v277
      %336 = vmatpush.msra.mxu0 %v276
      %337 = vmatpush.msra.mxu0 %v275
      %338 = vmatpush.msra.mxu0 %v274
      %339 = vmatpush.msra.mxu0 %v273
      %340 = vmatmul.f32.gmra.mxu0 %v322
      %v341 = vpop.f32.mrf.mxu0
      %v342 = vadd.f32 %v281, %v341
      %343 = vdwg.mxu0
      %vm344 = vcmp.gt.f32.partialorder %v342, 0.0
      %v345 = vmul.f32 %v342, 0.2
      %v346 = vsel %vm344, %v342, %v345
      %v347 = vld [vmem:[%s3] sm:$0xf]
      %v348 = vld [vmem:[%s4] sm:$0x1]
      %vm349 = vcmask 31744
      %v351 = vsel %vm349, %v346, 0
      %vm353 = vcmask 1043456
      %v355 = vsel %vm353, %v347, 0
      %357 = vmatpush.msra.mxu0 0.0
      %358 = vmatpush.msra.mxu0 0.0
      %359 = vmatpush.msra.mxu0 0.0
      %360 = vmatpush.msra.mxu0 0.0
      %361 = vmatpush.msra.mxu0 0.0
      %362 = vmatpush.msra.mxu0 0.0
      %363 = vmatpush.msra.mxu0 0.0
      %364 = vmatpush.msra.mxu0 0.0
      %365 = vmatpush.msra.mxu0 0.0
      %366 = vmatpush.msra.mxu0 0.0
      %367 = vmatpush.msra.mxu0 0.0
      %368 = vmatpush.msra.mxu0 0.0
      %369 = vmatpush.msra.mxu0 0.0
      %370 = vmatpush.msra.mxu0 0.0
      %371 = vmatpush.msra.mxu0 0.0
      %372 = vmatpush.msra.mxu0 %v355
      %373 = vmatmul.f32.gmra.mxu0 %v351
      %v374 = vpop.f32.mrf.mxu0
      %v375 = vadd.f32 %v348, %v374
      %376 = vdwg.mxu0
      %v377 = vsub.f32 0.0, %v375
      %v378 = vmul.f32 %v377, 1.442695
      %v379 = vpow.pop %v378
      %v380 = vadd.f32 %v379, 1.0
      %v381 = vrcp.pop %v380
      %v382 = vmul.f32 %v380, %v381
      %v383 = vsub.f32 1.0, %v382
      %v384 = vmul.f32 %v381, %v383
      %v385 = vadd.f32 %v381, %v384
      %vm386 = vweird.f32 %v380
      %vm387 = vweird.f32 %v381
      %vm388 = vmor %vm386, %vm387
      %v389 = vsel %vm388, %v381, %v385
      %v390 = vand.u32 2147483647, %v380
      %vm391 = vcmp.eq.f32.partialorder %v390, 8.507059e+37
      %v392 = vand.u32 %v380, 2147483648
      %v393 = vor.u32 1.1754944e-38, %v392
      %v394 = vsel %vm391, %v393, %v389
      %v395 = vmul.f32 1.0, %v394
      %v396 = vperm.slane %v395, 0
      %v397 = vlaneseq
      %v398 = vshrl.u32 %v397, 7
      %400 = vset.pattern.permute.xlu0 %v398
      %401 = vperm.xlu0 %400, %v396
      %v402 = vpop.permute.xlu0 %401
      %v403 = vlaneseq
      %v404 = vshrl.u32 %v403, 7
      %v405 = vadd.s32 %v404, 8
      %406 = vset.pattern.permute.xlu0 %v405
      %407 = vperm.xlu0 %406, %v396
      %v408 = vpop.permute.xlu0 %407
      %v409 = vlaneseq
      %v410 = vshrl.u32 %v409, 7
      %v411 = vadd.s32 %v410, 16
      %412 = vset.pattern.permute.xlu0 %v411
      %413 = vperm.xlu0 %412, %v396
      %v414 = vpop.permute.xlu0 %413
      %v415 = vlaneseq
      %v416 = vshrl.u32 %v415, 7
      %v417 = vadd.s32 %v416, 24
      %418 = vset.pattern.permute.xlu0 %v417
      %419 = vperm.xlu0 %418, %v396
      %v420 = vpop.permute.xlu0 %419
      %v421 = vlaneseq
      %v422 = vshrl.u32 %v421, 7
      %v423 = vadd.s32 %v422, 32
      %424 = vset.pattern.permute.xlu0 %v423
      %425 = vperm.xlu0 %424, %v396
      %v426 = vpop.permute.xlu0 %425
      %v427 = vlaneseq
      %v428 = vshrl.u32 %v427, 7
      %v429 = vadd.s32 %v428, 40
      %430 = vset.pattern.permute.xlu0 %v429
      %431 = vperm.xlu0 %430, %v396
      %v432 = vpop.permute.xlu0 %431
      %v433 = vlaneseq
      %v434 = vshrl.u32 %v433, 7
      %v435 = vadd.s32 %v434, 48
      %436 = vset.pattern.permute.xlu0 %v435
      %437 = vperm.xlu0 %436, %v396
      %v438 = vpop.permute.xlu0 %437
      %v439 = vlaneseq
      %v440 = vshrl.u32 %v439, 7
      %v441 = vadd.s32 %v440, 56
      %442 = vset.pattern.permute.xlu0 %v441
      %443 = vperm.xlu0 %442, %v396
      %v444 = vpop.permute.xlu0 %443
      %v445 = vmul.f32 %v225, %v402
      %v446 = vmul.f32 %v226, %v402
      %v447 = vmul.f32 %v227, %v408
      %v448 = vmul.f32 %v228, %v408
      %v449 = vmul.f32 %v229, %v414
      %v450 = vmul.f32 %v230, %v414
      %v451 = vmul.f32 %v231, %v420
      %v452 = vmul.f32 %v232, %v420
      %v453 = vmul.f32 %v233, %v426
      %v454 = vmul.f32 %v234, %v426
      %v455 = vmul.f32 %v235, %v432
      %v456 = vmul.f32 %v236, %v432
      %v457 = vmul.f32 %v237, %v438
      %v458 = vmul.f32 %v238, %v438
      %v459 = vmul.f32 %v239, %v444
      %v460 = vmul.f32 %v240, %v444
      %461 = vst [vmem:[%s224] sm:$0xff] %v445
      %462 = vst [vmem:[%s224 + $0x8] sm:$0xff] %v446
      %463 = vst [vmem:[%s224 + $0x10] sm:$0xff] %v447
      %464 = vst [vmem:[%s224 + $0x18] sm:$0xff] %v448
      %465 = vst [vmem:[%s224 + $0x20] sm:$0xff] %v449
      %466 = vst [vmem:[%s224 + $0x28] sm:$0xff] %v450
      %467 = vst [vmem:[%s224 + $0x30] sm:$0xff] %v451
      %468 = vst [vmem:[%s224 + $0x38] sm:$0xff] %v452
      %469 = vst [vmem:[%s224 + $0x40] sm:$0xff] %v453
      %470 = vst [vmem:[%s224 + $0x48] sm:$0xff] %v454
      %471 = vst [vmem:[%s224 + $0x50] sm:$0xff] %v455
      %472 = vst [vmem:[%s224 + $0x58] sm:$0xff] %v456
      %473 = vst [vmem:[%s224 + $0x60] sm:$0xff] %v457
      %474 = vst [vmem:[%s224 + $0x68] sm:$0xff] %v458
      %475 = vst [vmem:[%s224 + $0x70] sm:$0xff] %v459
      %476 = vst [vmem:[%s224 + $0x78] sm:$0xff] %v460
      %p477 = scmp.lt.s32.totalorder %s16, 1
      %s478 = scalar_select %p477, %s16, 1
      %s479 = smul.addr %s478, 16
      %s480 = smul.addr %s479, 8
      %s481 = scalar_lea.vmem %s5, %s480
      // Predicated region
      $region41: #{se_layer_forward.1} parent=39 // pred_check
        %p482 = pneg %p144
      $region42: #{se_layer_forward.1} parent=39 // pred_check_branch
        %484 = sbr.rel (%p482) target = $region44
      $region43: #{se_layer_forward.1} parent=39 // pred_region
        _
      $region44: #{se_layer_forward.1} parent=39 // pred_fallthru
        _
    $region40: #{se_layer_forward.1} parent=5 // pred_fallthru
      _
    %p485 = scmp.le.s32.totalorder 2, %s11
    // Predicated region
    $region45: #{se_layer_forward.1} parent=5 // pred_check
      %p486 = pneg %p485
    $region46: #{se_layer_forward.1} parent=5 // pred_check_branch
      %488 = sbr.rel (%p486) target = $region48
    $region47: #{se_layer_forward.1} parent=5 // pred_region
      %s489 = ssub.s32 %s11, 2
      // Predicated region
      $region49: #{se_layer_forward.1} parent=47 // pred_check
        %p490 = pneg %p150
      $region50: #{se_layer_forward.1} parent=47 // pred_check_branch
        %492 = sbr.rel (%p490) target = $region52
      $region51: #{se_layer_forward.1} parent=47 // pred_region
        %p493 = scmp.lt.s32.totalorder %s17, 1
        %s494 = scalar_select %p493, %s17, 1
        %s495 = smul.addr %s494, 16
        %s496 = smul.addr %s495, 8
        %s497 = scalar_lea.vmem %s5, %s496
      $region52: #{se_layer_forward.1} parent=47 // pred_fallthru
        _
    $region48: #{se_layer_forward.1} parent=5 // pred_fallthru
      _
  $region6: #{se_layer_forward.1} parent=0 // loop_footer
    %s15 = sadd.s32 1, %s11
  $region7: #{se_layer_forward.1} parent=0 // loop_footer_branch
    %10 = sbr.rel target = $region3
  $region8: #{se_layer_forward.1} parent=0 // loop_exit
    _

</llo_original>
